<compile_context>
chip_gen: v5e
topology: v5e:2x2
jax: 0.10.0
libtpu: 0.0.40
codegen_flags: <defaults>
</compile_context>

<pallas_src>
import functools

import jax
import jax.numpy as jnp
from jax.experimental import pallas as pl
from jax.experimental.pallas import tpu as pltpu


# -----------------------------------------------------------------------------
# Hardware helpers
# -----------------------------------------------------------------------------
def _vmem_capacity_bytes():
    try:
        return int(pltpu.get_tpu_info().vmem_capacity_bytes)
    except Exception:
        return 64 * 1024 * 1024          # conservative fallback (v7x per-TC VMEM)


def _select_tm(n_nodes):
    """Row-tile size: double-buffered f32 A tile stays under ~25% of VMEM."""
    cap = _vmem_capacity_bytes()
    budget = cap // 4
    tm = max(8, budget // (2 * n_nodes * 4))
    tm = min(tm, 1024, n_nodes)
    tm = max(8, (tm // 8) * 8)
    while tm > 8 and n_nodes % tm != 0:
        tm -= 8
    return tm


def _tiled_vmem_limit(tm, n, f_res, f_out, n_outs):
    """Scoped VMEM for a row-tiled call, derived from the working set."""
    need = (2 * tm * n * 4            # A tile, double-buffered
            + 2 * tm * 4 + n * 4      # degree scale vectors
            + 2 * n * f_res * 4       # resident h (generous: double-buffered)
            + 2 * f_res * f_out * 2   # bf16 weights (<=2 of them)
            + 2 * n_outs * tm * f_out * 4)
    limit = int(need * 1.5) + (4 << 20)
    cap = int(_vmem_capacity_bytes() * 0.75)
    return max(min(limit, cap), 16 << 20)


def _zero_map(ndim):
    return lambda: (0,) * ndim


# -----------------------------------------------------------------------------
# Fully fused kernel (small graphs): all layers + both heads + reparameterize
#   refs = (A, d_in, d_out, X, W_1..W_L, W_mean_pad, W_std_pad, eps_pad,
#           z_out, mean_out, std_out)
# -----------------------------------------------------------------------------
def _fused_encoder_kernel(*refs, n_layers):
    a_ref, din_ref, dout_ref, x_ref = refs[:4]
    layer_w_refs = refs[4:4 + n_layers]
    wm_ref, ws_ref, eps_ref = refs[4 + n_layers:7 + n_layers]
    z_ref, mean_ref, std_ref = refs[7 + n_layers:]

    # normalize adjacency on the VPU (f32), then cast once for the MXU
    a_bf = (a_ref[...] * din_ref[...] * dout_ref[...]).astype(jnp.bfloat16)

    h = x_ref[...]                                              # f32 [N, F_in]
    for w_ref in layer_w_refs:                                  # static unroll
        ah = jnp.dot(a_bf, h.astype(jnp.bfloat16),
                     preferred_element_type=jnp.float32)
        h = jnp.tanh(jnp.dot(ah.astype(jnp.bfloat16), w_ref[...],
                             preferred_element_type=jnp.float32))

    # heads: one shared A@h, two tile-aligned (lane-padded) head matmuls
    ah = jnp.dot(a_bf, h.astype(jnp.bfloat16),
                 preferred_element_type=jnp.float32)
    ah_bf = ah.astype(jnp.bfloat16)
    mean = jnp.dot(ah_bf, wm_ref[...], preferred_element_type=jnp.float32)
    std = jnp.maximum(jnp.dot(ah_bf, ws_ref[...],
                              preferred_element_type=jnp.float32), 0.0) + 1e-4
    mean_ref[...] = mean
    std_ref[...] = std
    z_ref[...] = eps_ref[...] * std + mean


def _fused_call(adj, din, dout, x, layer_ws, wm_pad, ws_pad, eps_pad):
    n = x.shape[0]
    lp = wm_pad.shape[1]
    ins = [adj, din, dout, x] + list(layer_ws) + [wm_pad, ws_pad, eps_pad]
    kernel = functools.partial(_fused_encoder_kernel, n_layers=len(layer_ws))
    out_sds = jax.ShapeDtypeStruct((n, lp), jnp.float32)
    return pl.pallas_call(
        kernel,
        grid=(),
        in_specs=[pl.BlockSpec(a.shape, _zero_map(a.ndim)) for a in ins],
        out_specs=(pl.BlockSpec((n, lp), lambda: (0, 0)),) * 3,
        out_shape=(out_sds,) * 3,
    )(*ins)


# -----------------------------------------------------------------------------
# Row-tiled kernels (production graph sizes): per layer, A block (TM, N),
# full h resident in VMEM, node axis "parallel" (shards across v7x's 2 TCs).
# -----------------------------------------------------------------------------
def _rgcn_layer_kernel(a_ref, din_ref, dout_ref, h_ref, w_ref, out_ref):
    a_bf = (a_ref[...] * din_ref[...] * dout_ref[...]).astype(jnp.bfloat16)
    ah = jnp.dot(a_bf, h_ref[...].astype(jnp.bfloat16),
                 preferred_element_type=jnp.float32)
    out_ref[...] = jnp.tanh(jnp.dot(ah.astype(jnp.bfloat16), w_ref[...],
                                    preferred_element_type=jnp.float32))


def _rgcn_layer_tiled(adj, din, dout, h, w, tm):
    n = adj.shape[0]
    f_in, f_out = w.shape
    limit = _tiled_vmem_limit(tm, n, f_in, f_out, 1)
    return pl.pallas_call(
        _rgcn_layer_kernel,
        grid=(n // tm,),
        in_specs=[
            pl.BlockSpec((tm, n), lambda i: (i, 0)),
            pl.BlockSpec((tm, 1), lambda i: (i, 0)),
            pl.BlockSpec((1, n), lambda i: (0, 0)),
            pl.BlockSpec((n, f_in), lambda i: (0, 0)),
            pl.BlockSpec((f_in, f_out), lambda i: (0, 0)),
        ],
        out_specs=pl.BlockSpec((tm, f_out), lambda i: (i, 0)),
        out_shape=jax.ShapeDtypeStruct((n, f_out), jnp.float32),
        compiler_params=pltpu.CompilerParams(
            dimension_semantics=("parallel",), vmem_limit_bytes=limit),
    )(adj, din, dout, h, w)


def _rgcn_head_kernel(a_ref, din_ref, dout_ref, h_ref, wm_ref, ws_ref, eps_ref,
                      z_ref, mean_ref, std_ref):
    a_bf = (a_ref[...] * din_ref[...] * dout_ref[...]).astype(jnp.bfloat16)
    ah = jnp.dot(a_bf, h_ref[...].astype(jnp.bfloat16),
                 preferred_element_type=jnp.float32)
    ah_bf = ah.astype(jnp.bfloat16)
    mean = jnp.dot(ah_bf, wm_ref[...], preferred_element_type=jnp.float32)
    std = jnp.maximum(jnp.dot(ah_bf, ws_ref[...],
                              preferred_element_type=jnp.float32), 0.0) + 1e-4
    mean_ref[...] = mean
    std_ref[...] = std
    z_ref[...] = eps_ref[...] * std + mean


def _rgcn_head_tiled(adj, din, dout, h, wm_pad, ws_pad, eps_pad, tm):
    n = adj.shape[0]
    f_l = h.shape[1]
    lp = wm_pad.shape[1]
    limit = _tiled_vmem_limit(tm, n, f_l, lp, 3)
    out_sds = jax.ShapeDtypeStruct((n, lp), jnp.float32)
    return pl.pallas_call(
        _rgcn_head_kernel,
        grid=(n // tm,),
        in_specs=[
            pl.BlockSpec((tm, n), lambda i: (i, 0)),
            pl.BlockSpec((tm, 1), lambda i: (i, 0)),
            pl.BlockSpec((1, n), lambda i: (0, 0)),
            pl.BlockSpec((n, f_l), lambda i: (0, 0)),
            pl.BlockSpec((f_l, lp), lambda i: (0, 0)),
            pl.BlockSpec((f_l, lp), lambda i: (0, 0)),
            pl.BlockSpec((tm, lp), lambda i: (i, 0)),
        ],
        out_specs=(pl.BlockSpec((tm, lp), lambda i: (i, 0)),) * 3,
        out_shape=(out_sds,) * 3,
        compiler_params=pltpu.CompilerParams(
            dimension_semantics=("parallel",), vmem_limit_bytes=limit),
    )(adj, din, dout, h, wm_pad, ws_pad, eps_pad)


# -----------------------------------------------------------------------------
# Parameters
# -----------------------------------------------------------------------------
def init_params(key, in_feature, num_relation, layers=(64, 64), latent_dim=32):
    dims = [in_feature] + list(layers)
    params = {"rgcn": []}
    keys = jax.random.split(key, len(layers) + 2)
    for i in range(len(layers)):
        scale = (6.0 / (dims[i] + dims[i + 1])) ** 0.5     # xavier_uniform (GraphConv default)
        params["rgcn"].append(jax.random.uniform(
            keys[i], (num_relation, dims[i], dims[i + 1]), jnp.float32, -scale, scale))
    scale = (6.0 / (layers[-1] + latent_dim)) ** 0.5
    params["w_mean"] = jax.random.uniform(
        keys[-2], (num_relation, layers[-1], latent_dim), jnp.float32, -scale, scale)
    params["w_std"] = jax.random.uniform(
        keys[-1], (num_relation, layers[-1], latent_dim), jnp.float32, -scale, scale)
    return params


def prepare_encoder_params(params):
    """One-time: relation-sum (valid since all relations share A), lane-pad the
    head weights to a 128 multiple, pre-cast everything to the MXU dtype."""
    latent = params["w_mean"].shape[-1]
    lp = -(-latent // 128) * 128
    layer_ws = [jnp.sum(w, axis=0).astype(jnp.bfloat16) for w in params["rgcn"]]
    pad = ((0, 0), (0, lp - latent))
    wm_pad = jnp.pad(jnp.sum(params["w_mean"], axis=0), pad).astype(jnp.bfloat16)
    ws_pad = jnp.pad(jnp.sum(params["w_std"], axis=0), pad).astype(jnp.bfloat16)
    return {"layer_ws": layer_ws, "wm_pad": wm_pad, "ws_pad": ws_pad}


# -----------------------------------------------------------------------------
# Forward
# -----------------------------------------------------------------------------
def rgcn_encoder_forward(prepared, adj, x, eps, *, force_tiled=False, tm=None):
    n = x.shape[0]
    latent = eps.shape[1]
    lp = prepared["wm_pad"].shape[1]

    # degree scale vectors (DGL GraphConv norm='both', degrees clamped to >= 1)
    din = jax.lax.rsqrt(jnp.maximum(adj.sum(axis=1, keepdims=True), 1.0))   # [N,1]
    dout = jax.lax.rsqrt(jnp.maximum(adj.sum(axis=0, keepdims=True), 1.0))  # [1,N]
    eps_pad = jnp.pad(eps, ((0, 0), (0, lp - latent)))

    working_set = 4 * (2 * n * n + 2 * n * x.shape[1] + 8 * n * lp)
    use_fused = (not force_tiled) and working_set <= (6 << 20)
    if not use_fused and n % 8 != 0:
        use_fused = True   # TODO(synk): pad N to a sublane multiple for the tiled path

    if use_fused:
        z_p, m_p, s_p = _fused_call(adj, din, dout, x, prepared["layer_ws"],
                                    prepared["wm_pad"], prepared["ws_pad"], eps_pad)
    else:
        tm = _select_tm(n) if tm is None else tm
        h = x
        for w in prepared["layer_ws"]:
            h = _rgcn_layer_tiled(adj, din, dout, h, w, tm)
        z_p, m_p, s_p = _rgcn_head_tiled(adj, din, dout, h, prepared["wm_pad"],
                                         prepared["ws_pad"], eps_pad, tm)

    return z_p[:, :latent], m_p[:, :latent], s_p[:, :latent]


# -----------------------------------------------------------------------------
# Pure-JAX reference (f32, per-relation matmuls) for correctness checking
# -----------------------------------------------------------------------------
def reference_forward(params, adj, x, eps):
    deg_in = jnp.maximum(adj.sum(axis=1), 1.0)
    deg_out = jnp.maximum(adj.sum(axis=0), 1.0)
    a_norm = adj * (deg_in ** -0.5)[:, None] * (deg_out ** -0.5)[None, :]

    def rgcn_layer(w_rel, h):
        return jnp.einsum("nf,rfo->no", a_norm @ h, w_rel)

    h = x
    for w in params["rgcn"]:
        h = jnp.tanh(rgcn_layer(w, h))
    mean = rgcn_layer(params["w_mean"], h)
    std = jax.nn.relu(rgcn_layer(params["w_std"], h)) + 1e-4
    return eps * std + mean, mean, std


def _make_inputs(key, n, in_feat, latent):
    k_adj, k_x, k_eps = jax.random.split(key, 3)
    a_rand = jax.random.bernoulli(k_adj, 0.4, (n, n)).astype(jnp.float32)
    adj = jnp.clip(a_rand + a_rand.T + jnp.eye(n, dtype=jnp.float32), 0.0, 1.0)
    x = jax.random.normal(k_x, (n, in_feat), jnp.float32)
    eps = jax.random.normal(k_eps, (n, latent), jnp.float32)
    return adj, x, eps


if __name__ == "__main__":
    IN_FEAT, NUM_REL, LAYERS, LATENT = 16, 2, (64, 64), 32

    key = jax.random.PRNGKey(0)
    k_small, k_big, k_par = jax.random.split(key, 3)

    params = init_params(k_par, IN_FEAT, NUM_REL, LAYERS, LATENT)
    prepared = prepare_encoder_params(params)          # hoisted out of the hot path

    fwd = jax.jit(rgcn_encoder_forward, static_argnames=("force_tiled", "tm"))

    # --- small graph: fully fused single pallas_call -------------------------
    adj, x, eps = _make_inputs(k_small, 8, IN_FEAT, LATENT)
    z, m_q_z, std_q_z = fwd(prepared, adj, x, eps)
    jax.block_until_ready((z, m_q_z, std_q_z))
    z_r, m_r, s_r = reference_forward(params, adj, x, eps)
    assert z.shape == (8, LATENT) and m_q_z.shape == (8, LATENT) and std_q_z.shape == (8, LATENT)
    assert bool(jnp.all(std_q_z >= 1e-4)) and bool(jnp.all(jnp.isfinite(z)))
    for got, ref in ((z, z_r), (m_q_z, m_r), (std_q_z, s_r)):
        assert bool(jnp.allclose(got, ref, atol=1e-1, rtol=1e-1))   # bf16 MXU tolerance

    # --- larger graph: exercise the row-tiled, "parallel"-axis path ----------
    adj2, x2, eps2 = _make_inputs(k_big, 256, IN_FEAT, LATENT)
    z2, m2, s2 = fwd(prepared, adj2, x2, eps2, force_tiled=True, tm=64)
    jax.block_until_ready((z2, m2, s2))
    z2_r, m2_r, s2_r = reference_forward(params, adj2, x2, eps2)
    assert z2.shape == (256, LATENT)
    assert bool(jnp.all(s2 >= 1e-4)) and bool(jnp.all(jnp.isfinite(z2)))
    for got, ref in ((z2, z2_r), (m2, m2_r), (s2, s2_r)):
        assert bool(jnp.allclose(got, ref, atol=1e-1, rtol=1e-1))

    print("KERNEL_OK")
</pallas_src>

<mosaic_0001>
module attributes {stable_mosaic.version = 11 : i64} {
  func.func @_fused_encoder_kernel(%arg0: memref<8x8xf32, #tpu.memory_space<vmem>>, %arg1: memref<8x1xf32, #tpu.memory_space<vmem>>, %arg2: memref<1x8xf32, #tpu.memory_space<vmem>>, %arg3: memref<8x16xf32, #tpu.memory_space<vmem>>, %arg4: memref<16x64xbf16, #tpu.memory_space<vmem>>, %arg5: memref<64x64xbf16, #tpu.memory_space<vmem>>, %arg6: memref<64x128xbf16, #tpu.memory_space<vmem>>, %arg7: memref<64x128xbf16, #tpu.memory_space<vmem>>, %arg8: memref<8x128xf32, #tpu.memory_space<vmem>>, %arg9: memref<8x128xf32, #tpu.memory_space<vmem>>, %arg10: memref<8x128xf32, #tpu.memory_space<vmem>>, %arg11: memref<8x128xf32, #tpu.memory_space<vmem>>) attributes {dimension_semantics = [], scalar_prefetch = 0 : i64, scratch_operands = 0 : i64, tpu.core_type = #tpu.core_type<tc>} {
    %c0 = arith.constant 0 : index
    %c0_0 = arith.constant 0 : index
    %0 = vector.load %arg0[%c0, %c0_0] : memref<8x8xf32, #tpu.memory_space<vmem>>, vector<8x8xf32>
    %c0_1 = arith.constant 0 : index
    %c0_2 = arith.constant 0 : index
    %1 = vector.load %arg1[%c0_1, %c0_2] : memref<8x1xf32, #tpu.memory_space<vmem>>, vector<8x1xf32>
    %2 = vector.broadcast %1 : vector<8x1xf32> to vector<8x8xf32>
    %3 = arith.mulf %0, %2 : vector<8x8xf32>
    %c0_3 = arith.constant 0 : index
    %c0_4 = arith.constant 0 : index
    %4 = vector.load %arg2[%c0_3, %c0_4] : memref<1x8xf32, #tpu.memory_space<vmem>>, vector<1x8xf32>
    %5 = vector.broadcast %4 : vector<1x8xf32> to vector<8x8xf32>
    %6 = arith.mulf %3, %5 : vector<8x8xf32>
    %7 = arith.truncf %6 : vector<8x8xf32> to vector<8x8xbf16>
    %c0_5 = arith.constant 0 : index
    %c0_6 = arith.constant 0 : index
    %8 = vector.load %arg3[%c0_5, %c0_6] : memref<8x16xf32, #tpu.memory_space<vmem>>, vector<8x16xf32>
    %9 = arith.truncf %8 : vector<8x16xf32> to vector<8x16xbf16>
    %cst = arith.constant dense<0.000000e+00> : vector<8x16xf32>
    %10 = tpu.matmul %7, %9, %cst {dimension_numbers = #tpu.dot_dimension_numbers<[1], [0], [0], [1], [0, 0, 1, 1], [], []>} : vector<8x8xbf16>, vector<8x16xbf16>, vector<8x16xf32> -> vector<8x16xf32>
    %11 = arith.truncf %10 : vector<8x16xf32> to vector<8x16xbf16>
    %c0_7 = arith.constant 0 : index
    %c0_8 = arith.constant 0 : index
    %12 = vector.load %arg4[%c0_7, %c0_8] : memref<16x64xbf16, #tpu.memory_space<vmem>>, vector<16x64xbf16>
    %cst_9 = arith.constant dense<0.000000e+00> : vector<8x64xf32>
    %13 = tpu.matmul %11, %12, %cst_9 {dimension_numbers = #tpu.dot_dimension_numbers<[1], [0], [0], [1], [0, 0, 1, 1], [], []>} : vector<8x16xbf16>, vector<16x64xbf16>, vector<8x64xf32> -> vector<8x64xf32>
    %14 = math.tanh %13 : vector<8x64xf32>
    %15 = arith.truncf %14 : vector<8x64xf32> to vector<8x64xbf16>
    %cst_10 = arith.constant dense<0.000000e+00> : vector<8x64xf32>
    %16 = tpu.matmul %7, %15, %cst_10 {dimension_numbers = #tpu.dot_dimension_numbers<[1], [0], [0], [1], [0, 0, 1, 1], [], []>} : vector<8x8xbf16>, vector<8x64xbf16>, vector<8x64xf32> -> vector<8x64xf32>
    %17 = arith.truncf %16 : vector<8x64xf32> to vector<8x64xbf16>
    %c0_11 = arith.constant 0 : index
    %c0_12 = arith.constant 0 : index
    %18 = vector.load %arg5[%c0_11, %c0_12] : memref<64x64xbf16, #tpu.memory_space<vmem>>, vector<64x64xbf16>
    %cst_13 = arith.constant dense<0.000000e+00> : vector<8x64xf32>
    %19 = tpu.matmul %17, %18, %cst_13 {dimension_numbers = #tpu.dot_dimension_numbers<[1], [0], [0], [1], [0, 0, 1, 1], [], []>} : vector<8x64xbf16>, vector<64x64xbf16>, vector<8x64xf32> -> vector<8x64xf32>
    %20 = math.tanh %19 : vector<8x64xf32>
    %21 = arith.truncf %20 : vector<8x64xf32> to vector<8x64xbf16>
    %cst_14 = arith.constant dense<0.000000e+00> : vector<8x64xf32>
    %22 = tpu.matmul %7, %21, %cst_14 {dimension_numbers = #tpu.dot_dimension_numbers<[1], [0], [0], [1], [0, 0, 1, 1], [], []>} : vector<8x8xbf16>, vector<8x64xbf16>, vector<8x64xf32> -> vector<8x64xf32>
    %23 = arith.truncf %22 : vector<8x64xf32> to vector<8x64xbf16>
    %c0_15 = arith.constant 0 : index
    %c0_16 = arith.constant 0 : index
    %24 = vector.load %arg6[%c0_15, %c0_16] : memref<64x128xbf16, #tpu.memory_space<vmem>>, vector<64x128xbf16>
    %cst_17 = arith.constant dense<0.000000e+00> : vector<8x128xf32>
    %25 = tpu.matmul %23, %24, %cst_17 {dimension_numbers = #tpu.dot_dimension_numbers<[1], [0], [0], [1], [0, 0, 1, 1], [], []>} : vector<8x64xbf16>, vector<64x128xbf16>, vector<8x128xf32> -> vector<8x128xf32>
    %c0_18 = arith.constant 0 : index
    %c0_19 = arith.constant 0 : index
    %26 = vector.load %arg7[%c0_18, %c0_19] : memref<64x128xbf16, #tpu.memory_space<vmem>>, vector<64x128xbf16>
    %cst_20 = arith.constant dense<0.000000e+00> : vector<8x128xf32>
    %27 = tpu.matmul %23, %26, %cst_20 {dimension_numbers = #tpu.dot_dimension_numbers<[1], [0], [0], [1], [0, 0, 1, 1], [], []>} : vector<8x64xbf16>, vector<64x128xbf16>, vector<8x128xf32> -> vector<8x128xf32>
    %cst_21 = arith.constant 0.000000e+00 : f32
    %28 = vector.broadcast %cst_21 : f32 to vector<8x128xf32>
    %29 = arith.maximumf %27, %28 : vector<8x128xf32>
    %cst_22 = arith.constant 9.99999974E-5 : f32
    %30 = vector.broadcast %cst_22 : f32 to vector<8x128xf32>
    %31 = arith.addf %29, %30 : vector<8x128xf32>
    %c0_23 = arith.constant 0 : index
    %c0_24 = arith.constant 0 : index
    %32 = vector.load %arg10[%c0_23, %c0_24] : memref<8x128xf32, #tpu.memory_space<vmem>>, vector<8x128xf32>
    tpu.vector_store %arg10[%c0_23, %c0_24], %25 {strides = array<i32>} : memref<8x128xf32, #tpu.memory_space<vmem>>, vector<8x128xf32>,
    %c0_25 = arith.constant 0 : index
    %c0_26 = arith.constant 0 : index
    %33 = vector.load %arg11[%c0_25, %c0_26] : memref<8x128xf32, #tpu.memory_space<vmem>>, vector<8x128xf32>
    tpu.vector_store %arg11[%c0_25, %c0_26], %31 {strides = array<i32>} : memref<8x128xf32, #tpu.memory_space<vmem>>, vector<8x128xf32>,
    %c0_27 = arith.constant 0 : index
    %c0_28 = arith.constant 0 : index
    %34 = vector.load %arg8[%c0_27, %c0_28] : memref<8x128xf32, #tpu.memory_space<vmem>>, vector<8x128xf32>
    %35 = arith.mulf %34, %31 : vector<8x128xf32>
    %36 = arith.addf %35, %25 : vector<8x128xf32>
    %c0_29 = arith.constant 0 : index
    %c0_30 = arith.constant 0 : index
    %37 = vector.load %arg9[%c0_29, %c0_30] : memref<8x128xf32, #tpu.memory_space<vmem>>, vector<8x128xf32>
    tpu.vector_store %arg9[%c0_29, %c0_30], %36 {strides = array<i32>} : memref<8x128xf32, #tpu.memory_space<vmem>>, vector<8x128xf32>,
    return
  }
}

</mosaic_0001>

<llo_original>
// kernel: rgcn_encoder_forward.1
$region0: #{rgcn_encoder_forward.1}
  #allocation0 [shape = 'u32[]', space=smem, size = 0x4, offset = 0x4, fixed_abs, tag = 'smem constant byte address 0x4 - core index']
  #allocation1 [shape = 'u32[72,128]{1,0:T(1,128)}', space=vmem, size = 0x9000, scoped, tag = 'internal scratch']
  %s0 = inlined_call_operand.vmem [shape: f32[8,8], index: 0, kind: input, shape index: {}]
  %s1 = inlined_call_operand.vmem [shape: f32[8,1], index: 1, kind: input, shape index: {}]
  %s2 = inlined_call_operand.vmem [shape: f32[1,8], index: 2, kind: input, shape index: {}]
  %s3 = inlined_call_operand.vmem [shape: f32[8,16], index: 3, kind: input, shape index: {}]
  %s4 = inlined_call_operand.vmem [shape: bf16[16,64], index: 4, kind: input, shape index: {}]
  %s5 = inlined_call_operand.hbm [shape: bf16[64,64], index: 5, kind: input, shape index: {}]
  %s6 = inlined_call_operand.hbm [shape: bf16[64,128], index: 6, kind: input, shape index: {}]
  %s7 = inlined_call_operand.hbm [shape: bf16[64,128], index: 7, kind: input, shape index: {}]
  %s8 = inlined_call_operand.vmem [shape: f32[8,128], index: 8, kind: input, shape index: {}]
  %s9 = inlined_call_operand.hbm [shape: f32[8,128], index: 9, kind: output, shape index: {0}]
  %s10 = inlined_call_operand.hbm [shape: f32[8,128], index: 10, kind: output, shape index: {1}]
  %s11 = inlined_call_operand.hbm [shape: f32[8,128], index: 11, kind: output, shape index: {2}]
  %12 = xla_tuple %s9, %s10, %s11
  %s13 = sld [smem:[#allocation0]]
  $region74: #{rgcn_encoder_forward.1} parent=0
    _
  %s15 = ssub.s32 1, %s13
  %s16 = scalar_select 0, %s15, %s13
  $region1: #{rgcn_encoder_forward.1} parent=0
    #allocation2 [shape = 'u8[16384]{0}', space=vmem, size = 0x4000, scoped, tag = 'input window, operand 5, single buffered']
    #allocation3 [shape = 's32[1]{0}', space=sflag, size = 0x4, scoped, tag = 'scoped memory for rgcn_encoder_forward.1']
    #allocation4 [shape = 's32[1]{0}', space=sflag, size = 0x4, scoped, tag = 'scoped memory for rgcn_encoder_forward.1']
    #allocation5 [shape = 'u8[16384]{0}', space=vmem, size = 0x4000, scoped, tag = 'input window, operand 6, single buffered']
    #allocation6 [shape = 's32[1]{0}', space=sflag, size = 0x4, scoped, tag = 'scoped memory for rgcn_encoder_forward.1']
    #allocation7 [shape = 'u8[16384]{0}', space=vmem, size = 0x4000, scoped, tag = 'input window, operand 7, single buffered']
    #allocation8 [shape = 'u8[4096]{0}', space=vmem, size = 0x1000, scoped, tag = 'output window, operand 0, single buffered']
    #allocation9 [shape = 'u8[4096]{0}', space=vmem, size = 0x1000, scoped, tag = 'output window, operand 1, single buffered']
    #allocation10 [shape = 's32[1]{0}', space=sflag, size = 0x4, scoped, tag = 'scoped memory for rgcn_encoder_forward.1']
    #allocation11 [shape = 'u8[4096]{0}', space=vmem, size = 0x1000, scoped, tag = 'output window, operand 2, single buffered']
    %17 = vsyncpa [#allocation3], 0
    %18 = vsyncpa [#allocation6], 0
    %19 = vsyncpa [#allocation4], 0
    %20 = vsyncpa [#allocation10], 0
    // Predicated region
    $region2: #{rgcn_encoder_forward.1} parent=1 // pred_check
      _
    $region3: #{rgcn_encoder_forward.1} parent=1 // pred_check_branch
      %22 = sbr.rel (0) target = $region5
    $region4: #{rgcn_encoder_forward.1} parent=1 // pred_region
      _
    $region5: #{rgcn_encoder_forward.1} parent=1 // pred_fallthru
      _
    // Predicated region
    $region6: #{rgcn_encoder_forward.1} parent=1 // pred_check
      _
    $region7: #{rgcn_encoder_forward.1} parent=1 // pred_check_branch
      %24 = sbr.rel (0) target = $region9
    $region8: #{rgcn_encoder_forward.1} parent=1 // pred_region
      _
    $region9: #{rgcn_encoder_forward.1} parent=1 // pred_fallthru
      _
    // Predicated region
    $region10: #{rgcn_encoder_forward.1} parent=1 // pred_check
      _
    $region11: #{rgcn_encoder_forward.1} parent=1 // pred_check_branch
      %26 = sbr.rel (0) target = $region13
    $region12: #{rgcn_encoder_forward.1} parent=1 // pred_region
      _
    $region13: #{rgcn_encoder_forward.1} parent=1 // pred_fallthru
      _
    // Predicated region
    $region14: #{rgcn_encoder_forward.1} parent=1 // pred_check
      _
    $region15: #{rgcn_encoder_forward.1} parent=1 // pred_check_branch
      %28 = sbr.rel (0) target = $region17
    $region16: #{rgcn_encoder_forward.1} parent=1 // pred_region
      _
    $region17: #{rgcn_encoder_forward.1} parent=1 // pred_fallthru
      _
    // Predicated region
    $region18: #{rgcn_encoder_forward.1} parent=1 // pred_check
      _
    $region19: #{rgcn_encoder_forward.1} parent=1 // pred_check_branch
      %30 = sbr.rel (0) target = $region21
    $region20: #{rgcn_encoder_forward.1} parent=1 // pred_region
      _
    $region21: #{rgcn_encoder_forward.1} parent=1 // pred_fallthru
      _
    // Predicated region
    $region22: #{rgcn_encoder_forward.1} parent=1 // pred_check
      _
    $region23: #{rgcn_encoder_forward.1} parent=1 // pred_check_branch
      %32 = sbr.rel (0) target = $region25
    $region24: #{rgcn_encoder_forward.1} parent=1 // pred_region
      %34 = vsyncadd [#allocation3], 0
      %s35 = sshll.u32 %s5, 4
      %s36 = int_to_ptr.hbm [resolvable:$true] %s35
      %s37 = sshll.u32 [#allocation2], 4
      %s38 = int_to_ptr.vmem [resolvable:$true] %s37
      %43 = dma.hbm_to_vmem [thread:$0]  %s36, 512, %s38, [#allocation3], 64, 64, 4
    $region25: #{rgcn_encoder_forward.1} parent=1 // pred_fallthru
      _
    // Predicated region
    $region26: #{rgcn_encoder_forward.1} parent=1 // pred_check
      _
    $region27: #{rgcn_encoder_forward.1} parent=1 // pred_check_branch
      %45 = sbr.rel (0) target = $region29
    $region28: #{rgcn_encoder_forward.1} parent=1 // pred_region
      %47 = vsyncadd [#allocation6], 0
      %s48 = sshll.u32 %s6, 4
      %s49 = int_to_ptr.hbm [resolvable:$true] %s48
      %s50 = sshll.u32 [#allocation5], 4
      %s51 = int_to_ptr.vmem [resolvable:$true] %s50
      %56 = dma.hbm_to_vmem [thread:$0]  %s49, 512, %s51, [#allocation6], 64, 64, 4
    $region29: #{rgcn_encoder_forward.1} parent=1 // pred_fallthru
      _
    // Predicated region
    $region30: #{rgcn_encoder_forward.1} parent=1 // pred_check
      _
    $region31: #{rgcn_encoder_forward.1} parent=1 // pred_check_branch
      %58 = sbr.rel (0) target = $region33
    $region32: #{rgcn_encoder_forward.1} parent=1 // pred_region
      %60 = vsyncadd [#allocation6], 0
      %s61 = sshll.u32 %s7, 4
      %s62 = int_to_ptr.hbm [resolvable:$true] %s61
      %s63 = sshll.u32 [#allocation7], 4
      %s64 = int_to_ptr.vmem [resolvable:$true] %s63
      %69 = dma.hbm_to_vmem [thread:$0]  %s62, 512, %s64, [#allocation6], 64, 64, 4
    $region33: #{rgcn_encoder_forward.1} parent=1 // pred_fallthru
      _
    // Predicated region
    $region34: #{rgcn_encoder_forward.1} parent=1 // pred_check
      _
    $region35: #{rgcn_encoder_forward.1} parent=1 // pred_check_branch
      %71 = sbr.rel (0) target = $region37
    $region36: #{rgcn_encoder_forward.1} parent=1 // pred_region
      _
    $region37: #{rgcn_encoder_forward.1} parent=1 // pred_fallthru
      _
    // Predicated region
    $region38: #{rgcn_encoder_forward.1} parent=1 // pred_check
      _
    $region39: #{rgcn_encoder_forward.1} parent=1 // pred_check_branch
      %73 = sbr.rel (0) target = $region41
    $region40: #{rgcn_encoder_forward.1} parent=1 // pred_region
      %75 = dma.done [#allocation3], 512
    $region41: #{rgcn_encoder_forward.1} parent=1 // pred_fallthru
      _
    // Predicated region
    $region42: #{rgcn_encoder_forward.1} parent=1 // pred_check
      _
    $region43: #{rgcn_encoder_forward.1} parent=1 // pred_check_branch
      %77 = sbr.rel (0) target = $region45
    $region44: #{rgcn_encoder_forward.1} parent=1 // pred_region
      %79 = dma.done [#allocation6], 512
    $region45: #{rgcn_encoder_forward.1} parent=1 // pred_fallthru
      _
    // Predicated region
    $region46: #{rgcn_encoder_forward.1} parent=1 // pred_check
      _
    $region47: #{rgcn_encoder_forward.1} parent=1 // pred_check_branch
      %81 = sbr.rel (0) target = $region49
    $region48: #{rgcn_encoder_forward.1} parent=1 // pred_region
      %83 = dma.done [#allocation6], 512
    $region49: #{rgcn_encoder_forward.1} parent=1 // pred_fallthru
      _
    %v85 = vld [vmem:[%s0] sm:$0xff]
    %v86 = vld [vmem:[%s1] sm:$0xff]
    %88 = vset.pattern.permute.xlu0 0
    %89 = vperm.xlu0 %88, %v86
    %v90 = vpop.permute.xlu0 %89
    %v92 = vmul.f32 %v85, %v90
    %v93 = vld [vmem:[%s2] sm:$0x1]
    %v95 = vperm.slane %v93, 0
    %v97 = vmul.f32 %v92, %v95
    %v98 = vpack.c.bf16 %v97, %v97
    %v99 = vld [vmem:[%s3] sm:$0xff]
    %v100 = vpack.c.bf16 %v99, %v99
    %vm101 = vcmask 64512
    %v103 = vsel %vm101, %v98, 0
    %vm105 = vcmask 1043456
    %v107 = vsel %vm105, %v100, 0
    %109 = vmatpush.bf16.msra.mxu0 0
    %110 = vmatpush.bf16.msra.mxu0 0
    %111 = vmatpush.bf16.msra.mxu0 0
    %112 = vmatpush.bf16.msra.mxu0 0
    %113 = vmatpush.bf16.msra.mxu0 0
    %114 = vmatpush.bf16.msra.mxu0 0
    %115 = vmatpush.bf16.msra.mxu0 0
    %116 = vmatpush.bf16.msra.mxu0 %v107
    %117 = vmatmul.bf16.gmra.mxu0 %v103
    %v118 = vpop.f32.mrf.mxu0
    %v119 = vadd.f32 0.0, %v118
    %v120 = vpop.f32.mrf.mxu0
    %121 = vdwg.mxu0
    %v122 = vpack.c.bf16 %v119, %v119
    %v123 = vld [vmem:[%s4] sm:$0xf]
    %v124 = vld [vmem:[%s4 + $0x4] sm:$0xf]
    %v127 = vunpack.c.l.b16 %v123
    %v128 = vunpack.c.l.b16 %v124
    %v129 = vpack.c.b16 %v128, %v127
    %vm131 = vcmask 130048
    %v133 = vsel %vm131, %v122, 0
    %135 = vmatpush.bf16.msra.mxu0 0
    %136 = vmatpush.bf16.msra.mxu0 0
    %137 = vmatpush.bf16.msra.mxu0 0
    %138 = vmatpush.bf16.msra.mxu0 0
    %139 = vmatpush.bf16.msra.mxu0 0
    %140 = vmatpush.bf16.msra.mxu0 0
    %141 = vmatpush.bf16.msra.mxu0 0
    %142 = vmatpush.bf16.msra.mxu0 %v129
    %143 = vmatmul.bf16.gmra.mxu0 %v133
    %v144 = vpop.f32.mrf.mxu0
    %v145 = vadd.f32 0.0, %v144
    %v146 = vpop.f32.mrf.mxu0
    %147 = vdwg.mxu0
    %v148 = vtanh.pop %v145
    %v149 = vpack.c.bf16 %v148, %v148
    %v151 = vsel %vm105, %v149, 0
    %153 = vmatpush.bf16.msra.mxu0 0
    %154 = vmatpush.bf16.msra.mxu0 0
    %155 = vmatpush.bf16.msra.mxu0 0
    %156 = vmatpush.bf16.msra.mxu0 0
    %157 = vmatpush.bf16.msra.mxu0 0
    %158 = vmatpush.bf16.msra.mxu0 0
    %159 = vmatpush.bf16.msra.mxu0 0
    %160 = vmatpush.bf16.msra.mxu0 %v151
    %161 = vmatmul.bf16.gmra.mxu0 %v103
    %v162 = vpop.f32.mrf.mxu0
    %v163 = vadd.f32 0.0, %v162
    %v164 = vpop.f32.mrf.mxu0
    %165 = vdwg.mxu0
    %v166 = vpack.c.bf16 %v163, %v163
    %v167 = vld [vmem:[#allocation2] sm:$0xf]
    %v168 = vld [vmem:[#allocation2 + $0x4] sm:$0xf]
    %v169 = vld [vmem:[#allocation2 + $0x8] sm:$0xf]
    %v170 = vld [vmem:[#allocation2 + $0xc] sm:$0xf]
    %v171 = vld [vmem:[#allocation2 + $0x10] sm:$0xf]
    %v172 = vld [vmem:[#allocation2 + $0x14] sm:$0xf]
    %v173 = vld [vmem:[#allocation2 + $0x18] sm:$0xf]
    %v174 = vld [vmem:[#allocation2 + $0x1c] sm:$0xf]
    %v183 = vunpack.c.l.b16 %v167
    %v184 = vunpack.c.l.b16 %v168
    %v185 = vunpack.c.l.b16 %v169
    %v186 = vunpack.c.l.b16 %v170
    %v187 = vunpack.c.l.b16 %v171
    %v188 = vunpack.c.l.b16 %v172
    %v189 = vunpack.c.l.b16 %v173
    %v190 = vunpack.c.l.b16 %v174
    %v191 = vpack.c.b16 %v184, %v183
    %v192 = vpack.c.b16 %v186, %v185
    %v193 = vpack.c.b16 %v188, %v187
    %v194 = vpack.c.b16 %v190, %v189
    %vm199 = vcmask 523264
    %v201 = vsel %vm199, %v166, 0
    %203 = vmatpush.bf16.msra.mxu0 0
    %204 = vmatpush.bf16.msra.mxu0 0
    %205 = vmatpush.bf16.msra.mxu0 0
    %206 = vmatpush.bf16.msra.mxu0 0
    %207 = vmatpush.bf16.msra.mxu0 %v194
    %208 = vmatpush.bf16.msra.mxu0 %v193
    %209 = vmatpush.bf16.msra.mxu0 %v192
    %210 = vmatpush.bf16.msra.mxu0 %v191
    %211 = vmatmul.bf16.gmra.mxu0 %v201
    %v212 = vpop.f32.mrf.mxu0
    %v213 = vadd.f32 0.0, %v212
    %v214 = vpop.f32.mrf.mxu0
    %215 = vdwg.mxu0
    %v216 = vtanh.pop %v213
    %v217 = vpack.c.bf16 %v216, %v216
    %v219 = vsel %vm105, %v217, 0
    %221 = vmatpush.bf16.msra.mxu0 0
    %222 = vmatpush.bf16.msra.mxu0 0
    %223 = vmatpush.bf16.msra.mxu0 0
    %224 = vmatpush.bf16.msra.mxu0 0
    %225 = vmatpush.bf16.msra.mxu0 0
    %226 = vmatpush.bf16.msra.mxu0 0
    %227 = vmatpush.bf16.msra.mxu0 0
    %228 = vmatpush.bf16.msra.mxu0 %v219
    %229 = vmatmul.bf16.gmra.mxu0 %v103
    %v230 = vpop.f32.mrf.mxu0
    %v231 = vadd.f32 0.0, %v230
    %v232 = vpop.f32.mrf.mxu0
    %233 = vdwg.mxu0
    %v234 = vpack.c.bf16 %v231, %v231
    %v235 = vld [vmem:[#allocation5] sm:$0xf]
    %v236 = vld [vmem:[#allocation5 + $0x4] sm:$0xf]
    %v237 = vld [vmem:[#allocation5 + $0x8] sm:$0xf]
    %v238 = vld [vmem:[#allocation5 + $0xc] sm:$0xf]
    %v239 = vld [vmem:[#allocation5 + $0x10] sm:$0xf]
    %v240 = vld [vmem:[#allocation5 + $0x14] sm:$0xf]
    %v241 = vld [vmem:[#allocation5 + $0x18] sm:$0xf]
    %v242 = vld [vmem:[#allocation5 + $0x1c] sm:$0xf]
    %v251 = vunpack.c.l.b16 %v235
    %v252 = vunpack.c.l.b16 %v236
    %v253 = vunpack.c.l.b16 %v237
    %v254 = vunpack.c.l.b16 %v238
    %v255 = vunpack.c.l.b16 %v239
    %v256 = vunpack.c.l.b16 %v240
    %v257 = vunpack.c.l.b16 %v241
    %v258 = vunpack.c.l.b16 %v242
    %v259 = vpack.c.b16 %v252, %v251
    %v260 = vpack.c.b16 %v254, %v253
    %v261 = vpack.c.b16 %v256, %v255
    %v262 = vpack.c.b16 %v258, %v257
    %v268 = vsel %vm199, %v234, 0
    %270 = vmatpush.bf16.msra.mxu0 0
    %271 = vmatpush.bf16.msra.mxu0 0
    %272 = vmatpush.bf16.msra.mxu0 0
    %273 = vmatpush.bf16.msra.mxu0 0
    %274 = vmatpush.bf16.msra.mxu0 %v262
    %275 = vmatpush.bf16.msra.mxu0 %v261
    %276 = vmatpush.bf16.msra.mxu0 %v260
    %277 = vmatpush.bf16.msra.mxu0 %v259
    %278 = vmatmul.bf16.gmra.mxu0 %v268
    %v279 = vpop.f32.mrf.mxu0
    %v280 = vadd.f32 0.0, %v279
    %v281 = vpop.f32.mrf.mxu0
    %282 = vdwg.mxu0
    %v283 = vld [vmem:[#allocation7] sm:$0xf]
    %v284 = vld [vmem:[#allocation7 + $0x4] sm:$0xf]
    %v285 = vld [vmem:[#allocation7 + $0x8] sm:$0xf]
    %v286 = vld [vmem:[#allocation7 + $0xc] sm:$0xf]
    %v287 = vld [vmem:[#allocation7 + $0x10] sm:$0xf]
    %v288 = vld [vmem:[#allocation7 + $0x14] sm:$0xf]
    %v289 = vld [vmem:[#allocation7 + $0x18] sm:$0xf]
    %v290 = vld [vmem:[#allocation7 + $0x1c] sm:$0xf]
    %v299 = vunpack.c.l.b16 %v283
    %v300 = vunpack.c.l.b16 %v284
    %v301 = vunpack.c.l.b16 %v285
    %v302 = vunpack.c.l.b16 %v286
    %v303 = vunpack.c.l.b16 %v287
    %v304 = vunpack.c.l.b16 %v288
    %v305 = vunpack.c.l.b16 %v289
    %v306 = vunpack.c.l.b16 %v290
    %v307 = vpack.c.b16 %v300, %v299
    %v308 = vpack.c.b16 %v302, %v301
    %v309 = vpack.c.b16 %v304, %v303
    %v310 = vpack.c.b16 %v306, %v305
    %315 = vmatpush.bf16.msra.mxu0 0
    %316 = vmatpush.bf16.msra.mxu0 0
    %317 = vmatpush.bf16.msra.mxu0 0
    %318 = vmatpush.bf16.msra.mxu0 0
    %319 = vmatpush.bf16.msra.mxu0 %v310
    %320 = vmatpush.bf16.msra.mxu0 %v309
    %321 = vmatpush.bf16.msra.mxu0 %v308
    %322 = vmatpush.bf16.msra.mxu0 %v307
    %323 = vmatmul.bf16.gmra.mxu0 %v268
    %v324 = vpop.f32.mrf.mxu0
    %v325 = vadd.f32 0.0, %v324
    %v326 = vpop.f32.mrf.mxu0
    %327 = vdwg.mxu0
    %v328 = vmax.f32 %v325, 0.0
    %v329 = vadd.f32 %v328, 0.0001
    %330 = vst [vmem:[#allocation9] sm:$0xff] %v280
    %331 = vst [vmem:[#allocation11] sm:$0xff] %v329
    %v332 = vld [vmem:[%s8] sm:$0xff]
    %v333 = vmul.f32 %v332, %v329
    %v334 = vadd.f32 %v333, %v280
    %335 = vst [vmem:[#allocation8] sm:$0xff] %v334
    // Predicated region
    $region50: #{rgcn_encoder_forward.1} parent=1 // pred_check
      _
    $region51: #{rgcn_encoder_forward.1} parent=1 // pred_check_branch
      %337 = sbr.rel (0) target = $region53
    $region52: #{rgcn_encoder_forward.1} parent=1 // pred_region
      %339 = vsyncadd [#allocation4], 0
      %s341 = sshll.u32 [#allocation8], 4
      %s342 = int_to_ptr.vmem [resolvable:$true] %s341
      %s343 = sshll.u32 %s9, 4
      %s344 = int_to_ptr.hbm [resolvable:$true] %s343
      %346 = dma.vmem_to_hbm [thread:$0]  %s342, 128, %s344, [#allocation4]
    $region53: #{rgcn_encoder_forward.1} parent=1 // pred_fallthru
      _
    // Predicated region
    $region54: #{rgcn_encoder_forward.1} parent=1 // pred_check
      _
    $region55: #{rgcn_encoder_forward.1} parent=1 // pred_check_branch
      %348 = sbr.rel (0) target = $region57
    $region56: #{rgcn_encoder_forward.1} parent=1 // pred_region
      %350 = vsyncadd [#allocation10], 0
      %s352 = sshll.u32 [#allocation9], 4
      %s353 = int_to_ptr.vmem [resolvable:$true] %s352
      %s354 = sshll.u32 %s10, 4
      %s355 = int_to_ptr.hbm [resolvable:$true] %s354
      %357 = dma.vmem_to_hbm [thread:$0]  %s353, 128, %s355, [#allocation10]
    $region57: #{rgcn_encoder_forward.1} parent=1 // pred_fallthru
      _
    // Predicated region
    $region58: #{rgcn_encoder_forward.1} parent=1 // pred_check
      _
    $region59: #{rgcn_encoder_forward.1} parent=1 // pred_check_branch
      %359 = sbr.rel (0) target = $region61
    $region60: #{rgcn_encoder_forward.1} parent=1 // pred_region
      %361 = vsyncadd [#allocation10], 0
      %s363 = sshll.u32 [#allocation11], 4
      %s364 = int_to_ptr.vmem [resolvable:$true] %s363
      %s365 = sshll.u32 %s11, 4
      %s366 = int_to_ptr.hbm [resolvable:$true] %s365
      %368 = dma.vmem_to_hbm [thread:$0]  %s364, 128, %s366, [#allocation10]
    $region61: #{rgcn_encoder_forward.1} parent=1 // pred_fallthru
      _
    // Predicated region
    $region62: #{rgcn_encoder_forward.1} parent=1 // pred_check
      _
    $region63: #{rgcn_encoder_forward.1} parent=1 // pred_check_branch
      %370 = sbr.rel (0) target = $region65
    $region64: #{rgcn_encoder_forward.1} parent=1 // pred_region
      %372 = dma.done [#allocation4], 128
    $region65: #{rgcn_encoder_forward.1} parent=1 // pred_fallthru
      _
    // Predicated region
    $region66: #{rgcn_encoder_forward.1} parent=1 // pred_check
      _
    $region67: #{rgcn_encoder_forward.1} parent=1 // pred_check_branch
      %374 = sbr.rel (0) target = $region69
    $region68: #{rgcn_encoder_forward.1} parent=1 // pred_region
      %376 = dma.done [#allocation10], 128
    $region69: #{rgcn_encoder_forward.1} parent=1 // pred_fallthru
      _
    // Predicated region
    $region70: #{rgcn_encoder_forward.1} parent=1 // pred_check
      _
    $region71: #{rgcn_encoder_forward.1} parent=1 // pred_check_branch
      %378 = sbr.rel (0) target = $region73
    $region72: #{rgcn_encoder_forward.1} parent=1 // pred_region
      %380 = dma.done [#allocation10], 128
    $region73: #{rgcn_encoder_forward.1} parent=1 // pred_fallthru
      _
    %381 = vsyncpa [#allocation3], 1
    %382 = vsyncpa [#allocation6], 1
    %383 = vsyncpa [#allocation4], 1
    %384 = vsyncpa [#allocation10], 1

</llo_original>
